<compile_context>
chip_gen: v7x
topology: tpu7x:2x2x1
jax: 0.10.0
libtpu: 0.0.40
codegen_flags: <defaults>
</compile_context>

<pallas_src>
import functools

import numpy as np
import jax
import jax.numpy as jnp
from jax.experimental import pallas as pl
from jax.experimental.pallas import tpu as pltpu

# TODO(synk): pretrained ResNet-18 weights cannot be loaded; parameters are
# deterministic random inits with the exact torchvision resnet18 shapes.
# TODO(synk): dropout / BatchNorm train-mode batch statistics are not
# implemented; eval-mode (inference) semantics are used (BN folded into the
# GEMM epilogue at init time).
# TODO(synk): true implicit-GEMM (fusing the kh*kw gather into the GEMM
# index_map / a manual DMA gather) is left as a follow-up; im2col patches are
# still materialized once in HBM, but weights are now VMEM-resident, K is
# un-padded, and all activations stay bf16.
# TODO(synk): layer1 convs have N=64 (<128 lanes) -> masked partial stores; a
# packed 128-lane activation layout between layer1 blocks is a follow-up.


# ---------------------------------------------------------------------------
# Tiling helpers
# ---------------------------------------------------------------------------


def _round_up(n, m):
    return -(-n // m) * m


def _choose_m_tile(M, pref):
    """Pick (tm, Mp): tile tm (multiple of 8) and padded row count Mp that tm
    divides. Never falls back to a full-dim block for huge M (v7x VMEM
    safety); instead pads M up to a multiple of the preferred tile."""
    Mp = _round_up(M, 8)
    if Mp <= pref:
        return Mp, Mp
    t = (pref // 8) * 8
    while t >= 8 and Mp % t:
        t -= 8
    if t >= 128:          # found a reasonably large divisor -> no padding
        return t, Mp
    return pref, _round_up(Mp, pref)


# ---------------------------------------------------------------------------
# Pallas kernels
# ---------------------------------------------------------------------------


def _mm_kernel(a_ref, b_ref, s_ref, t_ref, o_ref, *, relu):
    acc = jnp.dot(a_ref[...], b_ref[...], preferred_element_type=jnp.float32)
    y = acc * s_ref[...] + t_ref[...]
    if relu:
        y = jnp.maximum(y, 0.0)
    o_ref[...] = y.astype(o_ref.dtype)


def _mm_res_kernel(a_ref, b_ref, s_ref, t_ref, r_ref, o_ref, *, relu):
    acc = jnp.dot(a_ref[...], b_ref[...], preferred_element_type=jnp.float32)
    y = acc * s_ref[...] + t_ref[...] + r_ref[...].astype(jnp.float32)
    if relu:
        y = jnp.maximum(y, 0.0)
    o_ref[...] = y.astype(o_ref.dtype)


def fused_matmul(a, b, scale, shift, residual=None, relu=False,
                 out_dtype=jnp.bfloat16, tm_pref=256,
                 weight_budget=8 * 1024 * 1024):
    """(M,K)@(K,N) on the MXU with bf16 operands and f32 accumulation and a
    fused per-output-channel epilogue:
        out = [relu]( acc * scale + shift [+ residual] )
    The weight is kept fully VMEM-resident (full-K, full-N block with a
    constant index_map -> fetched exactly once) whenever it fits the budget,
    which also removes the K grid axis and the accumulator scratch."""
    M, K = a.shape
    K2, N = b.shape
    assert K == K2, (a.shape, b.shape)
    a = a.astype(jnp.bfloat16)
    b = b.astype(jnp.bfloat16)
    scale = scale.astype(jnp.float32).reshape(1, N)
    shift = shift.astype(jnp.float32).reshape(1, N)

    # N tiling: resident weight whenever possible; otherwise 128-aligned tiles.
    if 2 * K * N <= weight_budget or N % 128 != 0:
        tn = N
    else:
        cand = max((weight_budget // (2 * K) // 128) * 128, 128)
        while N % cand:
            cand -= 128
        tn = cand

    tm, Mp = _choose_m_tile(M, tm_pref)
    if Mp != M:
        a = jnp.pad(a, ((0, Mp - M), (0, 0)))
        if residual is not None:
            residual = jnp.pad(residual, ((0, Mp - M), (0, 0)))

    n_steps = N // tn
    m_steps = Mp // tm

    # Grid order (n, m): the weight block index is constant across the inner
    # M sweep, so Pallas elides its re-DMA.
    in_specs = [pl.BlockSpec((tm, K), lambda j, i: (i, 0)),
                pl.BlockSpec((K, tn), lambda j, i: (0, j)),
                pl.BlockSpec((1, tn), lambda j, i: (0, j)),
                pl.BlockSpec((1, tn), lambda j, i: (0, j))]
    args = [a, b, scale, shift]
    out_itemsize = np.dtype(out_dtype).itemsize
    bytes_accessed = (2 * a.size * n_steps + 2 * b.size
                      + out_itemsize * Mp * N + 8 * N)
    if residual is None:
        kernel = functools.partial(_mm_kernel, relu=relu)
    else:
        in_specs.append(pl.BlockSpec((tm, tn), lambda j, i: (i, j)))
        args.append(residual)
        bytes_accessed += residual.size * residual.dtype.itemsize
        kernel = functools.partial(_mm_res_kernel, relu=relu)

    out = pl.pallas_call(
        kernel,
        out_shape=jax.ShapeDtypeStruct((Mp, N), out_dtype),
        grid_spec=pltpu.PrefetchScalarGridSpec(
            num_scalar_prefetch=0,
            grid=(n_steps, m_steps),
            in_specs=in_specs,
            out_specs=pl.BlockSpec((tm, tn), lambda j, i: (i, j))),
        compiler_params=pltpu.CompilerParams(
            dimension_semantics=("parallel", "parallel"),
            vmem_limit_bytes=64 * 1024 * 1024),
        cost_estimate=pl.CostEstimate(flops=2 * Mp * N * K, transcendentals=0,
                                      bytes_accessed=int(bytes_accessed)),
    )(*args)
    if Mp != M:
        out = out[:M]
    return out


def _attn_kernel(q_ref, k_ref, v_ref, o_ref, *, scale):
    q = q_ref[0]                                   # (T, Dh) bf16
    k = k_ref[0]
    v = v_ref[0]
    s = jax.lax.dot_general(q, k, (((1,), (1,)), ((), ())),
                            preferred_element_type=jnp.float32) * scale
    s = s - jnp.max(s, axis=-1, keepdims=True)
    p = jnp.exp(s)
    p = p / jnp.sum(p, axis=-1, keepdims=True)     # exact divide (parity)
    o = jnp.dot(p.astype(v.dtype), v, preferred_element_type=jnp.float32)
    o_ref[0] = o.astype(o_ref.dtype)


def pallas_attention(qkv, num_heads):
    """Fused scaled-dot-product attention reading q/k/v directly out of the
    packed in_proj output (B, T, 3E) via BlockSpec column offsets, writing the
    merged-head output directly in (B, T, E) layout (no transposes/splits).
    Grid (B, H): both axes parallel, so v7x's two TensorCores both get work,
    and the per-step score tensor is only (T, T)."""
    B, T, E3 = qkv.shape
    E = E3 // 3
    H = num_heads
    Dh = E // H
    assert Dh % 128 == 0, "head_dim must be lane-aligned"
    scale = 1.0 / (Dh ** 0.5)
    blk = (1, T, Dh)
    return pl.pallas_call(
        functools.partial(_attn_kernel, scale=scale),
        out_shape=jax.ShapeDtypeStruct((B, T, E), jnp.bfloat16),
        grid=(B, H),
        in_specs=[pl.BlockSpec(blk, lambda b, h: (b, 0, h)),
                  pl.BlockSpec(blk, lambda b, h: (b, 0, H + h)),
                  pl.BlockSpec(blk, lambda b, h: (b, 0, 2 * H + h))],
        out_specs=pl.BlockSpec(blk, lambda b, h: (b, 0, h)),
        compiler_params=pltpu.CompilerParams(
            dimension_semantics=("parallel", "parallel")),
    )(qkv, qkv, qkv)


def _ln_res_kernel(x_ref, r_ref, g_ref, b_ref, o_ref, *, eps):
    x = x_ref[...].astype(jnp.float32) + r_ref[...].astype(jnp.float32)
    mean = jnp.mean(x, axis=-1, keepdims=True)
    var = jnp.mean(jnp.square(x - mean), axis=-1, keepdims=True)
    y = (x - mean) * jax.lax.rsqrt(var + eps)
    o_ref[...] = (y * g_ref[...] + b_ref[...]).astype(o_ref.dtype)


def pallas_layernorm_residual(x, r, gamma, beta, eps=1e-5):
    """LayerNorm(x + r): residual add fused into the normalization kernel.
    f32 statistics, bf16 output (feeds the next GEMM directly)."""
    orig = x.shape
    E = orig[-1]
    x2 = x.reshape(-1, E)
    r2 = r.reshape(-1, E)
    R = x2.shape[0]
    tr, Rp = _choose_m_tile(R, 256)
    if Rp != R:
        x2 = jnp.pad(x2, ((0, Rp - R), (0, 0)))
        r2 = jnp.pad(r2, ((0, Rp - R), (0, 0)))
    out = pl.pallas_call(
        functools.partial(_ln_res_kernel, eps=eps),
        out_shape=jax.ShapeDtypeStruct((Rp, E), jnp.bfloat16),
        grid=(Rp // tr,),
        in_specs=[pl.BlockSpec((tr, E), lambda i: (i, 0)),
                  pl.BlockSpec((tr, E), lambda i: (i, 0)),
                  pl.BlockSpec((1, E), lambda i: (0, 0)),
                  pl.BlockSpec((1, E), lambda i: (0, 0))],
        out_specs=pl.BlockSpec((tr, E), lambda i: (i, 0)),
        compiler_params=pltpu.CompilerParams(dimension_semantics=("parallel",)),
    )(x2, r2, gamma.reshape(1, E), beta.reshape(1, E))
    if Rp != R:
        out = out[:R]
    return out.reshape(orig)


# ---------------------------------------------------------------------------
# JAX glue (layout plumbing) built on the fused Pallas GEMM
# ---------------------------------------------------------------------------


def _im2col(x, kh, kw, stride, padding):
    """NHWC x -> (B*oh*ow, kh*kw*C) patches in (kh, kw, C) order. No K padding
    (a full-dim K block is legal and the MXU pads K internally for free)."""
    if padding:
        x = jnp.pad(x, ((0, 0), (padding, padding), (padding, padding), (0, 0)))
    B, H, W, C = x.shape
    oh = (H - kh) // stride + 1
    ow = (W - kw) // stride + 1
    cols = []
    for i in range(kh):
        for j in range(kw):
            cols.append(x[:, i:i + (oh - 1) * stride + 1:stride,
                          j:j + (ow - 1) * stride + 1:stride, :])
    patches = jnp.concatenate(cols, axis=-1) if len(cols) > 1 else cols[0]
    return patches.reshape(B * oh * ow, kh * kw * C), oh, ow


def conv_bn(x, p, relu=False, residual=None):
    """Conv2d (no bias) + folded eval-mode BatchNorm [+ residual] [+ ReLU],
    all in one fused Pallas GEMM with a VMEM-resident weight. x: NHWC bf16."""
    kh, kw, stride, pad = p['kh'], p['kw'], p['stride'], p['pad']
    patches, oh, ow = _im2col(x, kh, kw, stride, pad)
    res = None if residual is None else residual.reshape(-1, residual.shape[-1])
    out = fused_matmul(patches, p['w'], p['scale'], p['shift'],
                       residual=res, relu=relu, out_dtype=jnp.bfloat16)
    return out.reshape(x.shape[0], oh, ow, -1)


def maxpool_3x3_s2_p1(x):
    return jax.lax.reduce_window(
        x, jnp.array(-jnp.inf, x.dtype), jax.lax.max,
        (1, 3, 3, 1), (1, 2, 2, 1), [(0, 0), (1, 1), (1, 1), (0, 0)])


# (in_c, out_c, first_stride, num_blocks) for resnet18 layers 1..4
RESNET_LAYERS = [
    (64, 64, 1, 2),
    (64, 128, 2, 2),
    (128, 256, 2, 2),
    (256, 512, 2, 2),
]


def basic_block(x, p):
    identity = conv_bn(x, p['down']) if 'down' in p else x
    out = conv_bn(x, p['conv1'], relu=True)
    # conv2 + BN + residual add + ReLU all fused into the GEMM epilogue.
    return conv_bn(out, p['conv2'], relu=True, residual=identity)


def feature_extractor(x_nchw, p):
    """ResNet-18 minus final fc: (N, 3, H, W) -> (N, 512)."""
    x = jnp.transpose(x_nchw, (0, 2, 3, 1)).astype(jnp.bfloat16)   # NCHW -> NHWC
    x = conv_bn(x, p['stem'], relu=True)
    x = maxpool_3x3_s2_p1(x)
    for layer in p['layers']:
        for blk in layer:
            x = basic_block(x, blk)
    # AdaptiveAvgPool2d(1) + flatten (f32 accumulation of the mean).
    return jnp.mean(x.astype(jnp.float32), axis=(1, 2))


def linear(x, p, relu=False, out_dtype=jnp.bfloat16):
    """nn.Linear (weight pre-transposed to (in,out) bf16 at init) with the bias
    (and optional ReLU) fused into the GEMM epilogue. bf16 output feeds the
    next kernel directly (no standalone cast pass)."""
    orig = x.shape
    y = fused_matmul(x.reshape(-1, orig[-1]), p['w'], p['scale'], p['b'],
                     relu=relu, out_dtype=out_dtype)
    return y.reshape(orig[:-1] + (p['w'].shape[1],))


def multihead_attention(x, p, num_heads):
    # x: (B, T, E) bf16. in_proj emits the packed (B, T, 3E) qkv in bf16; the
    # attention kernel reads heads straight out of it and writes (B, T, E).
    qkv = linear(x, p['in_proj'])
    attn = pallas_attention(qkv, num_heads)
    return linear(attn, p['out_proj'])


def encoder_layer(x, p, num_heads):
    # Post-LN TransformerEncoderLayer (relu activation, dropout disabled/eval).
    a = multihead_attention(x, p, num_heads)
    x = pallas_layernorm_residual(x, a, p['ln1_g'], p['ln1_b'])
    h = linear(x, p['lin1'], relu=True)
    h = linear(h, p['lin2'])
    x = pallas_layernorm_residual(x, h, p['ln2_g'], p['ln2_b'])
    return x


def cardiac_cycle_transformer_forward(x, params, num_heads=4):
    """x: (B, T, C, H, W) -> (B, 1)."""
    B, T, C, H, W = x.shape
    # The per-cycle Python loop in the reference module applies the eval-mode
    # feature extractor independently per frame, so folding cycles into the
    # batch dimension is exactly equivalent.
    frames = x.reshape(B * T, C, H, W)
    feats = feature_extractor(frames, params['resnet'])        # (B*T, 512)
    h = feats.reshape(B, T, -1).astype(jnp.bfloat16)           # batch-first
    for lp in params['encoder']:
        h = encoder_layer(h, lp, num_heads)
    # transformer_out[-1] (seq-first) == h[:, -1] (batch-first).
    # Final fc has N=1: a tiled Pallas GEMM would be pure padding overhead.
    last = h[:, -1, :].astype(jnp.float32)
    return jnp.dot(last, params['fc_w']) + params['fc_b']      # (B, 1)


# ---------------------------------------------------------------------------
# Deterministic parameter init (resnet18 + 2-layer TransformerEncoder + fc)
# Weights are pre-reshaped / pre-transposed / BN-folded / bf16-cast at init.
# ---------------------------------------------------------------------------


def make_conv_bn(key, in_c, out_c, kh, kw, stride, pad, eps=1e-5):
    fan_in = in_c * kh * kw
    w = (jax.random.normal(key, (out_c, in_c, kh, kw), jnp.float32)
         * (2.0 / fan_in) ** 0.5)
    # GEMM-ready HWIO weight (kh*kw*in_c, out_c); NO K padding (full-dim K
    # blocks are legal and avoid streaming/multiplying zeros).
    w_g = jnp.transpose(w, (2, 3, 1, 0)).reshape(kh * kw * in_c, out_c)
    # Eval-mode BatchNorm folded into a per-channel affine epilogue.
    gamma = jnp.ones((out_c,), jnp.float32)
    beta = jnp.zeros((out_c,), jnp.float32)
    mean = jnp.zeros((out_c,), jnp.float32)
    var = jnp.ones((out_c,), jnp.float32)
    scale = gamma * jax.lax.rsqrt(var + eps)
    shift = beta - mean * scale
    return {'w': w_g.astype(jnp.bfloat16), 'scale': scale, 'shift': shift,
            'kh': kh, 'kw': kw, 'stride': stride, 'pad': pad}


def make_linear(key, in_d, out_d, w_scale=0.02):
    w = jax.random.normal(key, (out_d, in_d), jnp.float32) * w_scale
    return {'w': jnp.transpose(w).astype(jnp.bfloat16),   # (in, out) pre-transposed
            'scale': jnp.ones((out_d,), jnp.float32),
            'b': jnp.zeros((out_d,), jnp.float32)}


def init_params(key):
    kit = iter(jax.random.split(key, 64))

    resnet = {'stem': make_conv_bn(next(kit), 3, 64, 7, 7, 2, 3), 'layers': []}
    for (in_c, out_c, stride, nblocks) in RESNET_LAYERS:
        blocks = []
        for bi in range(nblocks):
            s = stride if bi == 0 else 1
            ic = in_c if bi == 0 else out_c
            blk = {'conv1': make_conv_bn(next(kit), ic, out_c, 3, 3, s, 1),
                   'conv2': make_conv_bn(next(kit), out_c, out_c, 3, 3, 1, 1)}
            if s != 1 or ic != out_c:
                blk['down'] = make_conv_bn(next(kit), ic, out_c, 1, 1, s, 0)
            blocks.append(blk)
        resnet['layers'].append(blocks)

    d, ff, n_layers = 512, 2048, 2
    enc = []
    for _ in range(n_layers):
        enc.append({
            'in_proj': make_linear(next(kit), d, 3 * d),
            'out_proj': make_linear(next(kit), d, d),
            'lin1': make_linear(next(kit), d, ff),
            'lin2': make_linear(next(kit), ff, d),
            'ln1_g': jnp.ones((d,), jnp.float32), 'ln1_b': jnp.zeros((d,), jnp.float32),
            'ln2_g': jnp.ones((d,), jnp.float32), 'ln2_b': jnp.zeros((d,), jnp.float32),
        })

    fc_w = jax.random.normal(next(kit), (d, 1), jnp.float32) * 0.02
    return {'resnet': resnet, 'encoder': enc,
            'fc_w': fc_w, 'fc_b': jnp.zeros((1,), jnp.float32)}


if __name__ == "__main__":
    key = jax.random.PRNGKey(0)
    pkey, xkey = jax.random.split(key)
    params = init_params(pkey)

    # Small input: batch=2, num_cycles=3, channels=3 (resnet input), 32x32 frames.
    B, T, C, H, W = 2, 3, 3, 32, 32
    x = jax.random.normal(xkey, (B, T, C, H, W), jnp.float32)

    out = cardiac_cycle_transformer_forward(x, params)
    out = jax.block_until_ready(out)
    assert out.shape == (B, 1), out.shape
    assert bool(jnp.all(jnp.isfinite(out)))
    print("KERNEL_OK")
</pallas_src>

<mosaic_0001>
module attributes {stable_mosaic.version = 11 : i64} {
  func.func @_mm_kernel(%arg0: i32, %arg1: i32, %arg2: memref<256x147xbf16, #tpu.memory_space<vmem>>, %arg3: memref<147x64xbf16, #tpu.memory_space<vmem>>, %arg4: memref<1x64xf32, #tpu.memory_space<vmem>>, %arg5: memref<1x64xf32, #tpu.memory_space<vmem>>, %arg6: memref<256x64xbf16, #tpu.memory_space<vmem>>) attributes {dimension_semantics = [#tpu.dimension_semantics<parallel>, #tpu.dimension_semantics<parallel>], iteration_bounds = array<i64: 1, 6>, scalar_prefetch = 0 : i64, scratch_operands = 0 : i64, tpu.core_type = #tpu.core_type<tc>, window_params = [{transform_indices = @transform_0, window_bounds = array<i64: 256, 147>}, {transform_indices = @transform_1, window_bounds = array<i64: 147, 64>}, {transform_indices = @transform_2, window_bounds = array<i64: 1, 64>}, {transform_indices = @transform_3, window_bounds = array<i64: 1, 64>}, {transform_indices = @transform_4, window_bounds = array<i64: 256, 64>}]} {
    %c0 = arith.constant 0 : index
    %c0_0 = arith.constant 0 : index
    %0 = vector.load %arg2[%c0, %c0_0] : memref<256x147xbf16, #tpu.memory_space<vmem>>, vector<256x147xbf16>
    %c0_1 = arith.constant 0 : index
    %c0_2 = arith.constant 0 : index
    %1 = vector.load %arg3[%c0_1, %c0_2] : memref<147x64xbf16, #tpu.memory_space<vmem>>, vector<147x64xbf16>
    %cst = arith.constant dense<0.000000e+00> : vector<256x64xf32>
    %2 = tpu.matmul %0, %1, %cst {dimension_numbers = #tpu.dot_dimension_numbers<[1], [0], [0], [1], [0, 0, 1, 1], [], []>} : vector<256x147xbf16>, vector<147x64xbf16>, vector<256x64xf32> -> vector<256x64xf32>
    %c0_3 = arith.constant 0 : index
    %c0_4 = arith.constant 0 : index
    %3 = vector.load %arg4[%c0_3, %c0_4] : memref<1x64xf32, #tpu.memory_space<vmem>>, vector<1x64xf32>
    %4 = vector.broadcast %3 : vector<1x64xf32> to vector<256x64xf32>
    %5 = arith.mulf %2, %4 : vector<256x64xf32>
    %c0_5 = arith.constant 0 : index
    %c0_6 = arith.constant 0 : index
    %6 = vector.load %arg5[%c0_5, %c0_6] : memref<1x64xf32, #tpu.memory_space<vmem>>, vector<1x64xf32>
    %7 = vector.broadcast %6 : vector<1x64xf32> to vector<256x64xf32>
    %8 = arith.addf %5, %7 : vector<256x64xf32>
    %cst_7 = arith.constant 0.000000e+00 : f32
    %9 = vector.broadcast %cst_7 : f32 to vector<256x64xf32>
    %10 = arith.maximumf %8, %9 : vector<256x64xf32>
    %11 = arith.truncf %10 : vector<256x64xf32> to vector<256x64xbf16>
    %c0_8 = arith.constant 0 : index
    %c0_9 = arith.constant 0 : index
    %12 = vector.load %arg6[%c0_8, %c0_9] : memref<256x64xbf16, #tpu.memory_space<vmem>>, vector<256x64xbf16>
    tpu.vector_store %arg6[%c0_8, %c0_9], %11 {strides = array<i32>} : memref<256x64xbf16, #tpu.memory_space<vmem>>, vector<256x64xbf16>,
    return
  }
  func.func @transform_0(%arg0: i32, %arg1: i32) -> (i32, i32) {
    %c0_i32 = arith.constant 0 : i32
    %c0_i32_0 = arith.constant 0 : i32
    return %arg1, %c0_i32 : i32, i32
  }
  func.func @transform_1(%arg0: i32, %arg1: i32) -> (i32, i32) {
    %c0_i32 = arith.constant 0 : i32
    %c0_i32_0 = arith.constant 0 : i32
    return %c0_i32, %arg0 : i32, i32
  }
  func.func @transform_2(%arg0: i32, %arg1: i32) -> (i32, i32) {
    %c0_i32 = arith.constant 0 : i32
    %c0_i32_0 = arith.constant 0 : i32
    return %c0_i32, %arg0 : i32, i32
  }
  func.func @transform_3(%arg0: i32, %arg1: i32) -> (i32, i32) {
    %c0_i32 = arith.constant 0 : i32
    %c0_i32_0 = arith.constant 0 : i32
    return %c0_i32, %arg0 : i32, i32
  }
  func.func @transform_4(%arg0: i32, %arg1: i32) -> (i32, i32) {
    %c0_i32 = arith.constant 0 : i32
    return %arg1, %arg0 : i32, i32
  }
}

</mosaic_0001>

<llo_original>
// kernel: tpu_custom_call.1
$region0: #{tpu_custom_call.1}
  #allocation0 [shape = 'u32[]', space=smem, size = 0x4, offset = 0x4, fixed_abs, tag = 'smem constant byte address 0x4 - core index']
  #allocation1 [shape = 'u32[144,128]{1,0:T(1,128)}', space=vmem, size = 0x12000, scoped, tag = 'internal scratch']
  %s0 = inlined_call_operand.hbm [shape: bf16[1536,147], index: 0, kind: input, shape index: {}]
  %s1 = inlined_call_operand.hbm [shape: bf16[147,64], index: 1, kind: input, shape index: {}]
  %s2 = inlined_call_operand.hbm [shape: f32[1,64], index: 2, kind: input, shape index: {}]
  %s3 = inlined_call_operand.hbm [shape: f32[1,64], index: 3, kind: input, shape index: {}]
  %s4 = inlined_call_operand.hbm [shape: bf16[1536,64], index: 4, kind: output, shape index: {}]
  %s5 = sld [smem:[#allocation0]]
  $region65: #{tpu_custom_call.1} parent=0
    _
  %s7 = ssub.s32 1, %s5
  %s8 = scalar_select 0, %s7, %s5
  $region1: #{tpu_custom_call.1} parent=0
    #allocation2 [shape = 'u8[262144]{0}', space=vmem, size = 0x40000, scoped, tag = 'input window, operand 0']
    #allocation3 [shape = 's32[2]{0}', space=sflag, size = 0x8, scoped, tag = 'scoped memory for tpu_custom_call.1']
    #allocation4 [shape = 's32[2]{0}', space=sflag, size = 0x8, scoped, tag = 'scoped memory for tpu_custom_call.1']
    #allocation5 [shape = 'u8[38912]{0}', space=vmem, size = 0x9800, scoped, tag = 'input window, operand 1, single buffered']
    #allocation6 [shape = 's32[1]{0}', space=sflag, size = 0x4, scoped, tag = 'scoped memory for tpu_custom_call.1']
    #allocation7 [shape = 'u8[512]{0}', space=vmem, size = 0x400, scoped, tag = 'input window, operand 2, single buffered']
    #allocation8 [shape = 'u8[512]{0}', space=vmem, size = 0x400, scoped, tag = 'input window, operand 3, single buffered']
    #allocation9 [shape = 's32[1]{0}', space=sflag, size = 0x4, scoped, tag = 'scoped memory for tpu_custom_call.1']
    #allocation10 [shape = 'u8[131072]{0}', space=vmem, size = 0x20000, scoped, tag = 'output window, operand 0']
    %9 = vsyncpa [#allocation3], 0
    %s10 = scalar_lea.sflag [#allocation3], 1
    %11 = vsyncpa %s10, 0
    %12 = vsyncpa [#allocation6], 0
    %13 = vsyncpa [#allocation9], 0
    %14 = vsyncpa [#allocation4], 0
    %s15 = scalar_lea.sflag [#allocation4], 1
    %16 = vsyncpa %s15, 0
    loop: start=0, step=1, limit=8
    $region2: #{tpu_custom_call.1} parent=1 // loop_pre_header
      _
    $region3: #{tpu_custom_call.1} parent=1 // loop_header
      %s18 = sphi 0, %s22
      %p19 = scmp.ge.s32.totalorder %s18, 8
      %s25 = sphi 0, %s37
      %s26 = sphi 0, %s33
      %s27 = sphi 0, %s25
      %s28 = sphi 0, %s26
      %s29 = sphi 0, %s27
      %s30 = sphi 0, %s28
      %s40 = sphi 0, %s42
      %s43 = sphi 0, %s40
      %s44 = sphi 0, %s43
      %s60 = sphi 0, %s44
      %s66 = sphi 0, %s68
      %s69 = sphi 0, %s66
      %s70 = sphi 0, %s69
      %s86 = sphi 0, %s70
      %s92 = sphi 0, %s94
      %s95 = sphi 0, %s92
      %s96 = sphi 0, %s95
      %s112 = sphi 0, %s96
      %s118 = sphi 0, %s120
      %s121 = sphi 0, %s118
      %s122 = sphi 0, %s121
      %s138 = sphi 0, %s122
      %s146 = sphi 0, %s148
      %s149 = sphi 0, %s146
      %s150 = sphi 0, %s149
      %s166 = sphi 0, %s150
    $region4: #{tpu_custom_call.1} parent=1 // loop_header_branch
      %21 = sbr.rel (%p19) target = $region8
    $region5: #{tpu_custom_call.1} parent=1 // loop_body
      %s23 = ssub.s32 %s18, 1
      %s24 = ssub.s32 %s18, 2
      %s31 = sadd.s32 1, %s26
      %p32 = scmp.ge.s32.totalorder %s31, 6
      %s33 = scalar_select %p32, 0, %s31
      %s34 = sadd.s32 1, %s25
      %s35 = scalar_select %p32, %s34, %s25
      %p36 = scmp.ge.s32.totalorder %s35, 1
      %s37 = scalar_select %p36, 0, %s35
      %s38 = ssub.s32 %s26, %s33
      %p39 = scmp.eq.s32.totalorder %s38, 0
      %s41 = sadd.s32 %s40, 1
      %s42 = scalar_select %p39, %s40, %s41
      %p45 = pneg %p39
      %p46 = scmp.eq.s32.totalorder %s18, 5
      %p47 = por %p45, %p46
      %p48 = scmp.ne.s32.totalorder %s40, %s43
      %p49 = scmp.eq.s32.totalorder %s18, 0
      %p50 = por %p48, %p49
      %p51 = scmp.ne.s32.totalorder %s40, %s43
      %p52 = scmp.eq.s32.totalorder %s23, 5
      %p53 = por %p51, %p52
      %p54 = scmp.ne.s32.totalorder %s43, %s44
      %p55 = scmp.eq.s32.totalorder %s23, 0
      %p56 = por %p54, %p55
      %p57 = scmp.ne.s32.totalorder %s43, %s44
      %p58 = scmp.eq.s32.totalorder %s24, 5
      %p59 = por %p57, %p58
      %p61 = scmp.ne.s32.totalorder %s44, %s60
      %p62 = scmp.eq.s32.totalorder %s24, 0
      %p63 = por %p61, %p62
      %s64 = ssub.s32 %s25, %s37
      %p65 = scmp.eq.s32.totalorder %s64, 0
      %s67 = sadd.s32 %s66, 1
      %s68 = scalar_select %p65, %s66, %s67
      %p71 = pneg %p65
      %p72 = scmp.eq.s32.totalorder %s18, 5
      %p73 = por %p71, %p72
      %p74 = scmp.ne.s32.totalorder %s66, %s69
      %p75 = scmp.eq.s32.totalorder %s18, 0
      %p76 = por %p74, %p75
      %p77 = scmp.ne.s32.totalorder %s66, %s69
      %p78 = scmp.eq.s32.totalorder %s23, 5
      %p79 = por %p77, %p78
      %p80 = scmp.ne.s32.totalorder %s69, %s70
      %p81 = scmp.eq.s32.totalorder %s23, 0
      %p82 = por %p80, %p81
      %p83 = scmp.ne.s32.totalorder %s69, %s70
      %p84 = scmp.eq.s32.totalorder %s24, 5
      %p85 = por %p83, %p84
      %p87 = scmp.ne.s32.totalorder %s70, %s86
      %p88 = scmp.eq.s32.totalorder %s24, 0
      %p89 = por %p87, %p88
      %s90 = ssub.s32 %s25, %s37
      %p91 = scmp.eq.s32.totalorder %s90, 0
      %s93 = sadd.s32 %s92, 1
      %s94 = scalar_select %p91, %s92, %s93
      %p97 = pneg %p91
      %p98 = scmp.eq.s32.totalorder %s18, 5
      %p99 = por %p97, %p98
      %p100 = scmp.ne.s32.totalorder %s92, %s95
      %p101 = scmp.eq.s32.totalorder %s18, 0
      %p102 = por %p100, %p101
      %p103 = scmp.ne.s32.totalorder %s92, %s95
      %p104 = scmp.eq.s32.totalorder %s23, 5
      %p105 = por %p103, %p104
      %p106 = scmp.ne.s32.totalorder %s95, %s96
      %p107 = scmp.eq.s32.totalorder %s23, 0
      %p108 = por %p106, %p107
      %p109 = scmp.ne.s32.totalorder %s95, %s96
      %p110 = scmp.eq.s32.totalorder %s24, 5
      %p111 = por %p109, %p110
      %p113 = scmp.ne.s32.totalorder %s96, %s112
      %p114 = scmp.eq.s32.totalorder %s24, 0
      %p115 = por %p113, %p114
      %s116 = ssub.s32 %s25, %s37
      %p117 = scmp.eq.s32.totalorder %s116, 0
      %s119 = sadd.s32 %s118, 1
      %s120 = scalar_select %p117, %s118, %s119
      %p123 = pneg %p117
      %p124 = scmp.eq.s32.totalorder %s18, 5
      %p125 = por %p123, %p124
      %p126 = scmp.ne.s32.totalorder %s118, %s121
      %p127 = scmp.eq.s32.totalorder %s18, 0
      %p128 = por %p126, %p127
      %p129 = scmp.ne.s32.totalorder %s118, %s121
      %p130 = scmp.eq.s32.totalorder %s23, 5
      %p131 = por %p129, %p130
      %p132 = scmp.ne.s32.totalorder %s121, %s122
      %p133 = scmp.eq.s32.totalorder %s23, 0
      %p134 = por %p132, %p133
      %p135 = scmp.ne.s32.totalorder %s121, %s122
      %p136 = scmp.eq.s32.totalorder %s24, 5
      %p137 = por %p135, %p136
      %p139 = scmp.ne.s32.totalorder %s122, %s138
      %p140 = scmp.eq.s32.totalorder %s24, 0
      %p141 = por %p139, %p140
      %s142 = ssub.s32 %s26, %s33
      %s143 = ssub.s32 %s25, %s37
      %s144 = sor.u32 %s142, %s143
      %p145 = scmp.eq.s32.totalorder %s144, 0
      %s147 = sadd.s32 %s146, 1
      %s148 = scalar_select %p145, %s146, %s147
      %p151 = pneg %p145
      %p152 = scmp.eq.s32.totalorder %s18, 5
      %p153 = por %p151, %p152
      %p154 = scmp.ne.s32.totalorder %s146, %s149
      %p155 = scmp.eq.s32.totalorder %s18, 0
      %p156 = por %p154, %p155
      %p157 = scmp.ne.s32.totalorder %s146, %s149
      %p158 = scmp.eq.s32.totalorder %s23, 5
      %p159 = por %p157, %p158
      %p160 = scmp.ne.s32.totalorder %s149, %s150
      %p161 = scmp.eq.s32.totalorder %s23, 0
      %p162 = por %p160, %p161
      %p163 = scmp.ne.s32.totalorder %s149, %s150
      %p164 = scmp.eq.s32.totalorder %s24, 5
      %p165 = por %p163, %p164
      %p167 = scmp.ne.s32.totalorder %s150, %s166
      %p168 = scmp.eq.s32.totalorder %s24, 0
      %p169 = por %p167, %p168
      %p170 = scmp.le.s32.totalorder 1, %s18
      %p171 = scmp.lt.s32.totalorder %s18, 7
      %p172 = pnand %p170, %p171
      %p173 = pneg %p172
      // Predicated region
      $region9: #{tpu_custom_call.1} parent=5 // pred_check
        _
      $region10: #{tpu_custom_call.1} parent=5 // pred_check_branch
        %175 = sbr.rel (%p172) target = $region12
      $region11: #{tpu_custom_call.1} parent=5 // pred_region
        %s176 = ssub.s32 %s18, 1
        // Predicated region
        $region13: #{tpu_custom_call.1} parent=11 // pred_check
          %p177 = pneg %p82
        $region14: #{tpu_custom_call.1} parent=11 // pred_check_branch
          %179 = sbr.rel (%p177) target = $region16
        $region15: #{tpu_custom_call.1} parent=11 // pred_region
          %s181 = ssub.s32 1216, 1216
          %182 = vsyncadd [#allocation6], %s181
          %s183 = smul.addr %s27, 64
          %s184 = scalar_lea.hbm %s1, %s183
          %s185 = sshll.u32 [#allocation5], 4
          %s186 = int_to_ptr.vmem [resolvable:$true] %s185
          %191 = dma.hbm_to_vmem [thread:$0]  %s184, 1216, %s186, [#allocation6], 64, 64, 4
        $region16: #{tpu_custom_call.1} parent=11 // pred_fallthru
          _
        // Predicated region
        $region17: #{tpu_custom_call.1} parent=11 // pred_check
          %p192 = pneg %p108
        $region18: #{tpu_custom_call.1} parent=11 // pred_check_branch
          %194 = sbr.rel (%p192) target = $region20
        $region19: #{tpu_custom_call.1} parent=11 // pred_region
          %s196 = ssub.s32 16, 16
          %197 = vsyncadd [#allocation6], %s196
          %s198 = smul.addr %s27, 16
          %s199 = scalar_lea.hbm %s2, %s198
          %s201 = sshll.u32 [#allocation7], 4
          %s202 = int_to_ptr.vmem [resolvable:$true] %s201
          %204 = dma.hbm_to_vmem [thread:$0]  %s199, 16, %s202, [#allocation6]
        $region20: #{tpu_custom_call.1} parent=11 // pred_fallthru
          _
        // Predicated region
        $region21: #{tpu_custom_call.1} parent=11 // pred_check
          %p205 = pneg %p134
        $region22: #{tpu_custom_call.1} parent=11 // pred_check_branch
          %207 = sbr.rel (%p205) target = $region24
        $region23: #{tpu_custom_call.1} parent=11 // pred_region
          %s209 = ssub.s32 16, 16
          %210 = vsyncadd [#allocation9], %s209
          %s211 = smul.addr %s27, 16
          %s212 = scalar_lea.hbm %s3, %s211
          %s214 = sshll.u32 [#allocation8], 4
          %s215 = int_to_ptr.vmem [resolvable:$true] %s214
          %217 = dma.hbm_to_vmem [thread:$0]  %s212, 16, %s215, [#allocation9]
        $region24: #{tpu_custom_call.1} parent=11 // pred_fallthru
          _
      $region12: #{tpu_custom_call.1} parent=5 // pred_fallthru
        _
      %p218 = scmp.lt.s32.totalorder %s18, 6
      // Predicated region
      $region25: #{tpu_custom_call.1} parent=5 // pred_check
        %p219 = pneg %p218
      $region26: #{tpu_custom_call.1} parent=5 // pred_check_branch
        %221 = sbr.rel (%p219) target = $region28
      $region27: #{tpu_custom_call.1} parent=5 // pred_region
        // Predicated region
        $region29: #{tpu_custom_call.1} parent=27 // pred_check
          %p222 = pneg %p50
        $region30: #{tpu_custom_call.1} parent=27 // pred_check_branch
          %224 = sbr.rel (%p222) target = $region32
        $region31: #{tpu_custom_call.1} parent=27 // pred_region
          %s225 = sand.u32 %s40, 1
          %s226 = scalar_lea.sflag [#allocation3], %s225
          %s227 = sand.u32 %s40, 1
          %s228 = smul.addr %s227, 256
          %s229 = scalar_lea.vmem [#allocation2], %s228
          %s230 = smul.u32 32, %s26
          %s232 = ssub.s32 4096, 4096
          %233 = vsyncadd %s226, %s232
          %s234 = smul.addr %s230, 2
          %s235 = smul.addr %s234, 64
          %s236 = scalar_lea.hbm %s0, %s235
          %s237 = sshll.u32 %s229, 4
          %s238 = int_to_ptr.vmem [resolvable:$true] %s237
          %243 = dma.hbm_to_vmem [thread:$0]  %s236, 4096, %s238, %s226, 128, 128, 8
        $region32: #{tpu_custom_call.1} parent=27 // pred_fallthru
          _
      $region28: #{tpu_custom_call.1} parent=5 // pred_fallthru
        _
      %p244 = scmp.le.s32.totalorder 1, %s18
      %p245 = scmp.lt.s32.totalorder %s18, 7
      %p246 = pnand %p244, %p245
      %p247 = pneg %p246
      // Predicated region
      $region33: #{tpu_custom_call.1} parent=5 // pred_check
        _
      $region34: #{tpu_custom_call.1} parent=5 // pred_check_branch
        %249 = sbr.rel (%p246) target = $region36
      $region35: #{tpu_custom_call.1} parent=5 // pred_region
        %s250 = ssub.s32 %s18, 1
        %s251 = sand.u32 %s43, 1
        %s252 = scalar_lea.sflag [#allocation3], %s251
        %s253 = sand.u32 %s43, 1
        %s254 = smul.addr %s253, 256
        %s255 = scalar_lea.vmem [#allocation2], %s254
        // Predicated region
        $region37: #{tpu_custom_call.1} parent=35 // pred_check
          %p256 = pneg %p56
        $region38: #{tpu_custom_call.1} parent=35 // pred_check_branch
          %258 = sbr.rel (%p256) target = $region40
        $region39: #{tpu_custom_call.1} parent=35 // pred_region
          %259 = dma.done %s252, 4096
        $region40: #{tpu_custom_call.1} parent=35 // pred_fallthru
          _
        // Predicated region
        $region41: #{tpu_custom_call.1} parent=35 // pred_check
          %p260 = pneg %p82
        $region42: #{tpu_custom_call.1} parent=35 // pred_check_branch
          %262 = sbr.rel (%p260) target = $region44
        $region43: #{tpu_custom_call.1} parent=35 // pred_region
          %263 = dma.done [#allocation6], 1216
        $region44: #{tpu_custom_call.1} parent=35 // pred_fallthru
          _
        // Predicated region
        $region45: #{tpu_custom_call.1} parent=35 // pred_check
          %p264 = pneg %p108
        $region46: #{tpu_custom_call.1} parent=35 // pred_check_branch
          %266 = sbr.rel (%p264) target = $region48
        $region47: #{tpu_custom_call.1} parent=35 // pred_region
          %267 = dma.done [#allocation6], 16
        $region48: #{tpu_custom_call.1} parent=35 // pred_fallthru
          _
        // Predicated region
        $region49: #{tpu_custom_call.1} parent=35 // pred_check
          %p268 = pneg %p134
        $region50: #{tpu_custom_call.1} parent=35 // pred_check_branch
          %270 = sbr.rel (%p268) target = $region52
        $region51: #{tpu_custom_call.1} parent=35 // pred_region
          %271 = dma.done [#allocation9], 16
        $region52: #{tpu_custom_call.1} parent=35 // pred_fallthru
          _
        %s272 = sand.u32 %s43, 1
        %s273 = scalar_lea.sflag [#allocation3], %s272
        %s274 = sand.u32 %s43, 1
        %s275 = smul.addr %s274, 256
        %s276 = scalar_lea.vmem [#allocation2], %s275
        %p277 = pneg %p56
        %p278 = pneg %p53
        %p279 = pneg %p82
        %p280 = pneg %p79
        %p281 = pneg %p108
        %p282 = pneg %p105
        %p283 = pneg %p134
        %p284 = pneg %p131
        %p285 = pneg %p162
        %p286 = pneg %p159
        %s287 = sand.u32 %s149, 1
        %s288 = scalar_lea.sflag [#allocation4], %s287
        %s289 = sand.u32 %s149, 1
        %s290 = smul.addr %s289, 128
        %s291 = scalar_lea.vmem [#allocation10], %s290
        %s292 = smul.u32 32, %s28
        %s293 = smul.u32 32, %s28
        %v295 = vld [vmem:[%s255] sm:$0xff]
        %v296 = vld [vmem:[%s255 + $0x8] sm:$0xff]
        %v297 = vld [vmem:[%s255 + $0x10] sm:$0xff]
        %v298 = vld [vmem:[%s255 + $0x18] sm:$0xff]
        %v299 = vld [vmem:[%s255 + $0x20] sm:$0xff]
        %v300 = vld [vmem:[%s255 + $0x28] sm:$0xff]
        %v301 = vld [vmem:[%s255 + $0x30] sm:$0xff]
        %v302 = vld [vmem:[%s255 + $0x38] sm:$0xff]
        %v303 = vld [vmem:[%s255 + $0x40] sm:$0xff]
        %v304 = vld [vmem:[%s255 + $0x48] sm:$0xff]
        %v305 = vld [vmem:[%s255 + $0x50] sm:$0xff]
        %v306 = vld [vmem:[%s255 + $0x58] sm:$0xff]
        %v307 = vld [vmem:[%s255 + $0x60] sm:$0xff]
        %v308 = vld [vmem:[%s255 + $0x68] sm:$0xff]
        %v309 = vld [vmem:[%s255 + $0x70] sm:$0xff]
        %v310 = vld [vmem:[%s255 + $0x78] sm:$0xff]
        %v311 = vld [vmem:[%s255 + $0x80] sm:$0xff]
        %v312 = vld [vmem:[%s255 + $0x88] sm:$0xff]
        %v313 = vld [vmem:[%s255 + $0x90] sm:$0xff]
        %v314 = vld [vmem:[%s255 + $0x98] sm:$0xff]
        %v315 = vld [vmem:[%s255 + $0xa0] sm:$0xff]
        %v316 = vld [vmem:[%s255 + $0xa8] sm:$0xff]
        %v317 = vld [vmem:[%s255 + $0xb0] sm:$0xff]
        %v318 = vld [vmem:[%s255 + $0xb8] sm:$0xff]
        %v319 = vld [vmem:[%s255 + $0xc0] sm:$0xff]
        %v320 = vld [vmem:[%s255 + $0xc8] sm:$0xff]
        %v321 = vld [vmem:[%s255 + $0xd0] sm:$0xff]
        %v322 = vld [vmem:[%s255 + $0xd8] sm:$0xff]
        %v323 = vld [vmem:[%s255 + $0xe0] sm:$0xff]
        %v324 = vld [vmem:[%s255 + $0xe8] sm:$0xff]
        %v325 = vld [vmem:[%s255 + $0xf0] sm:$0xff]
        %v326 = vld [vmem:[%s255 + $0xf8] sm:$0xff]
        %v327 = vld [vmem:[#allocation5] sm:$0xf]
        %v328 = vld [vmem:[#allocation5 + $0x4] sm:$0xf]
        %v329 = vld [vmem:[#allocation5 + $0x8] sm:$0xf]
        %v330 = vld [vmem:[#allocation5 + $0xc] sm:$0xf]
        %v331 = vld [vmem:[#allocation5 + $0x10] sm:$0xf]
        %v332 = vld [vmem:[#allocation5 + $0x14] sm:$0xf]
        %v333 = vld [vmem:[#allocation5 + $0x18] sm:$0xf]
        %v334 = vld [vmem:[#allocation5 + $0x1c] sm:$0xf]
        %v335 = vld [vmem:[#allocation5 + $0x20] sm:$0xf]
        %v336 = vld [vmem:[#allocation5 + $0x24] sm:$0xf]
        %v337 = vld [vmem:[#allocation5 + $0x28] sm:$0xf]
        %v338 = vld [vmem:[#allocation5 + $0x2c] sm:$0xf]
        %v339 = vld [vmem:[#allocation5 + $0x30] sm:$0xf]
        %v340 = vld [vmem:[#allocation5 + $0x34] sm:$0xf]
        %v341 = vld [vmem:[#allocation5 + $0x38] sm:$0xf]
        %v342 = vld [vmem:[#allocation5 + $0x3c] sm:$0xf]
        %v343 = vld [vmem:[#allocation5 + $0x40] sm:$0xf]
        %v344 = vld [vmem:[#allocation5 + $0x44] sm:$0xf]
        %v345 = vld [vmem:[#allocation5 + $0x48] sm:$0x3]
        %v378 = vunpack.c.l.b16 %v295
        %v379 = vunpack.c.h.b16 %v295
        %v380 = vunpack.c.l.b16 %v296
        %v381 = vunpack.c.h.b16 %v296
        %v382 = vunpack.c.l.b16 %v297
        %v383 = vunpack.c.h.b16 %v297
        %v384 = vunpack.c.l.b16 %v298
        %v385 = vunpack.c.h.b16 %v298
        %v386 = vunpack.c.l.b16 %v299
        %v387 = vunpack.c.h.b16 %v299
        %v388 = vunpack.c.l.b16 %v300
        %v389 = vunpack.c.h.b16 %v300
        %v390 = vunpack.c.l.b16 %v301
        %v391 = vunpack.c.h.b16 %v301
        %v392 = vunpack.c.l.b16 %v302
        %v393 = vunpack.c.h.b16 %v302
        %v394 = vunpack.c.l.b16 %v303
        %v395 = vunpack.c.h.b16 %v303
        %v396 = vunpack.c.l.b16 %v304
        %v397 = vunpack.c.h.b16 %v304
        %v398 = vunpack.c.l.b16 %v305
        %v399 = vunpack.c.h.b16 %v305
        %v400 = vunpack.c.l.b16 %v306
        %v401 = vunpack.c.h.b16 %v306
        %v402 = vunpack.c.l.b16 %v307
        %v403 = vunpack.c.h.b16 %v307
        %v404 = vunpack.c.l.b16 %v308
        %v405 = vunpack.c.h.b16 %v308
        %v406 = vunpack.c.l.b16 %v309
        %v407 = vunpack.c.h.b16 %v309
        %v408 = vunpack.c.l.b16 %v310
        %v409 = vunpack.c.h.b16 %v310
        %v410 = vunpack.c.l.b16 %v311
        %v411 = vunpack.c.h.b16 %v311
        %v412 = vunpack.c.l.b16 %v312
        %v413 = vunpack.c.h.b16 %v312
        %v414 = vunpack.c.l.b16 %v313
        %v415 = vunpack.c.h.b16 %v313
        %v416 = vunpack.c.l.b16 %v314
        %v417 = vunpack.c.h.b16 %v314
        %v418 = vunpack.c.l.b16 %v315
        %v419 = vunpack.c.h.b16 %v315
        %v420 = vunpack.c.l.b16 %v316
        %v421 = vunpack.c.h.b16 %v316
        %v422 = vunpack.c.l.b16 %v317
        %v423 = vunpack.c.h.b16 %v317
        %v424 = vunpack.c.l.b16 %v318
        %v425 = vunpack.c.h.b16 %v318
        %v426 = vunpack.c.l.b16 %v319
        %v427 = vunpack.c.h.b16 %v319
        %v428 = vunpack.c.l.b16 %v320
        %v429 = vunpack.c.h.b16 %v320
        %v430 = vunpack.c.l.b16 %v321
        %v431 = vunpack.c.h.b16 %v321
        %v432 = vunpack.c.l.b16 %v322
        %v433 = vunpack.c.h.b16 %v322
        %v434 = vunpack.c.l.b16 %v323
        %v435 = vunpack.c.h.b16 %v323
        %v436 = vunpack.c.l.b16 %v324
        %v437 = vunpack.c.h.b16 %v324
        %v438 = vunpack.c.l.b16 %v325
        %v439 = vunpack.c.h.b16 %v325
        %v440 = vunpack.c.l.b16 %v326
        %v441 = vunpack.c.h.b16 %v326
        %v442 = vpack.c.b16 %v380, %v378
        %v443 = vpack.c.b16 %v381, %v379
        %v444 = vpack.c.b16 %v384, %v382
        %v445 = vpack.c.b16 %v385, %v383
        %v446 = vpack.c.b16 %v388, %v386
        %v447 = vpack.c.b16 %v389, %v387
        %v448 = vpack.c.b16 %v392, %v390
        %v449 = vpack.c.b16 %v393, %v391
        %v450 = vpack.c.b16 %v396, %v394
        %v451 = vpack.c.b16 %v397, %v395
        %v452 = vpack.c.b16 %v400, %v398
        %v453 = vpack.c.b16 %v401, %v399
        %v454 = vpack.c.b16 %v404, %v402
        %v455 = vpack.c.b16 %v405, %v403
        %v456 = vpack.c.b16 %v408, %v406
        %v457 = vpack.c.b16 %v409, %v407
        %v458 = vpack.c.b16 %v412, %v410
        %v459 = vpack.c.b16 %v413, %v411
        %v460 = vpack.c.b16 %v416, %v414
        %v461 = vpack.c.b16 %v417, %v415
        %v462 = vpack.c.b16 %v420, %v418
        %v463 = vpack.c.b16 %v421, %v419
        %v464 = vpack.c.b16 %v424, %v422
        %v465 = vpack.c.b16 %v425, %v423
        %v466 = vpack.c.b16 %v428, %v426
        %v467 = vpack.c.b16 %v429, %v427
        %v468 = vpack.c.b16 %v432, %v430
        %v469 = vpack.c.b16 %v433, %v431
        %v470 = vpack.c.b16 %v436, %v434
        %v471 = vpack.c.b16 %v437, %v435
        %v472 = vpack.c.b16 %v440, %v438
        %v473 = vpack.c.b16 %v441, %v439
        %v509 = vunpack.c.l.b16 %v327
        %v510 = vunpack.c.l.b16 %v328
        %v511 = vunpack.c.l.b16 %v329
        %v512 = vunpack.c.l.b16 %v330
        %v513 = vunpack.c.l.b16 %v331
        %v514 = vunpack.c.l.b16 %v332
        %v515 = vunpack.c.l.b16 %v333
        %v516 = vunpack.c.l.b16 %v334
        %v517 = vunpack.c.l.b16 %v335
        %v518 = vunpack.c.l.b16 %v336
        %v519 = vunpack.c.l.b16 %v337
        %v520 = vunpack.c.l.b16 %v338
        %v521 = vunpack.c.l.b16 %v339
        %v522 = vunpack.c.l.b16 %v340
        %v523 = vunpack.c.l.b16 %v341
        %v524 = vunpack.c.l.b16 %v342
        %v525 = vunpack.c.l.b16 %v343
        %v526 = vunpack.c.l.b16 %v344
        %v527 = vunpack.c.l.b16 %v345
        %v528 = vpack.c.b16 %v510, %v509
        %v529 = vpack.c.b16 %v512, %v511
        %v530 = vpack.c.b16 %v514, %v513
        %v531 = vpack.c.b16 %v516, %v515
        %v532 = vpack.c.b16 %v518, %v517
        %v533 = vpack.c.b16 %v520, %v519
        %v534 = vpack.c.b16 %v522, %v521
        %v535 = vpack.c.b16 %v524, %v523
        %v536 = vpack.c.b16 %v526, %v525
        %v537 = vpack.c.b16 %v527, %v527
        %vm547 = vcmask 154624
        %v549 = vsel %vm547, %v443, 0
        %v552 = vsel %vm547, %v445, 0
        %v555 = vsel %vm547, %v447, 0
        %v558 = vsel %vm547, %v449, 0
        %v561 = vsel %vm547, %v451, 0
        %v564 = vsel %vm547, %v453, 0
        %v567 = vsel %vm547, %v455, 0
        %v570 = vsel %vm547, %v457, 0
        %v573 = vsel %vm547, %v459, 0
        %v576 = vsel %vm547, %v461, 0
        %v579 = vsel %vm547, %v463, 0
        %v582 = vsel %vm547, %v465, 0
        %v585 = vsel %vm547, %v467, 0
        %v588 = vsel %vm547, %v469, 0
        %v591 = vsel %vm547, %v471, 0
        %v594 = vsel %vm547, %v473, 0
        %vm596 = vcmask 1040384
        %vm597 = vcmask 1041408
        %v598 = vsel %vm596, 4294967295, 65535
        %v599 = vsel %vm597, %v598, 0
        %v601 = vand.u32 %v537, %v599
        %603 = vmatprep.subr.bf16.mxu0 0
        %604 = vmatpush1.bf16.msra.mxu0 %v528
        %605 = vmatprep.subr.bf16.mxu0 0
        %606 = vmatpush1.bf16.msra.mxu0 %v529
        %607 = vmatprep.subr.bf16.mxu0 0
        %608 = vmatpush1.bf16.msra.mxu0 %v530
        %609 = vmatprep.subr.bf16.mxu0 0
        %610 = vmatpush1.bf16.msra.mxu0 %v531
        %611 = vmatprep.subr.bf16.mxu0 0
        %612 = vmatpush1.bf16.msra.mxu0 %v532
        %613 = vmatprep.subr.bf16.mxu0 0
        %614 = vmatpush1.bf16.msra.mxu0 %v533
        %615 = vmatprep.subr.bf16.mxu0 0
        %616 = vmatpush1.bf16.msra.mxu0 %v534
        %617 = vmatprep.subr.bf16.mxu0 0
        %618 = vmatpush1.bf16.msra.mxu0 %v535
        %619 = vmatprep.subr.bf16.mxu0 0
        %620 = vmatpush1.bf16.msra.mxu0 %v536
        %621 = vmatprep.subr.bf16.mxu0 0
        %622 = vmatpush1.bf16.msra.mxu0 %v601
        %623 = vmatprep.subr.bf16.mxu0 0
        %624 = vmatpush1.bf16.msra.mxu0 0
        %625 = vmatprep.subr.bf16.mxu0 0
        %626 = vmatpush1.bf16.msra.mxu0 0
        %627 = vmatprep.subr.bf16.mxu0 0
        %628 = vmatpush1.bf16.msra.mxu0 0
        %629 = vmatprep.subr.bf16.mxu0 0
        %630 = vmatpush1.bf16.msra.mxu0 0
        %631 = vmatprep.subr.bf16.mxu0 0
        %632 = vmatpush1.bf16.msra.mxu0 0
        %633 = vmatprep.subr.bf16.mxu0 0
        %634 = vmatpush1.bf16.msra.mxu0 0
        %635 = vmatprep.mubr.bf16.mxu0 %v549
        %636 = vmatmul.mubr.bf16.gmra.mrb[0].mxu0 %v442
        %v637 = vpop.f32.mrb[0].mxu0
        %v638 = vadd.f32 0.0, %v637
        %v639 = vpop.f32.mrb[0].mxu0
        %v640 = vpop.f32.mrb[0].mxu0
        %v641 = vadd.f32 0.0, %v640
        %v642 = vpop.f32.mrb[0].mxu0
        %643 = vmatprep.mubr.bf16.mxu0 %v552
        %644 = vmatmul.mubr.bf16.gmra.mrb[0].mxu0 %v444
        %v645 = vpop.f32.mrb[0].mxu0
        %v646 = vadd.f32 0.0, %v645
        %v647 = vpop.f32.mrb[0].mxu0
        %v648 = vpop.f32.mrb[0].mxu0
        %v649 = vadd.f32 0.0, %v648
        %v650 = vpop.f32.mrb[0].mxu0
        %651 = vmatprep.mubr.bf16.mxu0 %v555
        %652 = vmatmul.mubr.bf16.gmra.mrb[0].mxu0 %v446
        %v653 = vpop.f32.mrb[0].mxu0
        %v654 = vadd.f32 0.0, %v653
        %v655 = vpop.f32.mrb[0].mxu0
        %v656 = vpop.f32.mrb[0].mxu0
        %v657 = vadd.f32 0.0, %v656
        %v658 = vpop.f32.mrb[0].mxu0
        %659 = vmatprep.mubr.bf16.mxu0 %v558
        %660 = vmatmul.mubr.bf16.gmra.mrb[0].mxu0 %v448
        %v661 = vpop.f32.mrb[0].mxu0
        %v662 = vadd.f32 0.0, %v661
        %v663 = vpop.f32.mrb[0].mxu0
        %v664 = vpop.f32.mrb[0].mxu0
        %v665 = vadd.f32 0.0, %v664
        %v666 = vpop.f32.mrb[0].mxu0
        %667 = vmatprep.mubr.bf16.mxu0 %v561
        %668 = vmatmul.mubr.bf16.gmra.mrb[0].mxu0 %v450
        %v669 = vpop.f32.mrb[0].mxu0
        %v670 = vadd.f32 0.0, %v669
        %v671 = vpop.f32.mrb[0].mxu0
        %v672 = vpop.f32.mrb[0].mxu0
        %v673 = vadd.f32 0.0, %v672
        %v674 = vpop.f32.mrb[0].mxu0
        %675 = vmatprep.mubr.bf16.mxu0 %v564
        %676 = vmatmul.mubr.bf16.gmra.mrb[0].mxu0 %v452
        %v677 = vpop.f32.mrb[0].mxu0
        %v678 = vadd.f32 0.0, %v677
        %v679 = vpop.f32.mrb[0].mxu0
        %v680 = vpop.f32.mrb[0].mxu0
        %v681 = vadd.f32 0.0, %v680
        %v682 = vpop.f32.mrb[0].mxu0
        %683 = vmatprep.mubr.bf16.mxu0 %v567
        %684 = vmatmul.mubr.bf16.gmra.mrb[0].mxu0 %v454
        %v685 = vpop.f32.mrb[0].mxu0
        %v686 = vadd.f32 0.0, %v685
        %v687 = vpop.f32.mrb[0].mxu0
        %v688 = vpop.f32.mrb[0].mxu0
        %v689 = vadd.f32 0.0, %v688
        %v690 = vpop.f32.mrb[0].mxu0
        %691 = vmatprep.mubr.bf16.mxu0 %v570
        %692 = vmatmul.mubr.bf16.gmra.mrb[0].mxu0 %v456
        %v693 = vpop.f32.mrb[0].mxu0
        %v694 = vadd.f32 0.0, %v693
        %v695 = vpop.f32.mrb[0].mxu0
        %v696 = vpop.f32.mrb[0].mxu0
        %v697 = vadd.f32 0.0, %v696
        %v698 = vpop.f32.mrb[0].mxu0
        %699 = vmatprep.mubr.bf16.mxu0 %v573
        %700 = vmatmul.mubr.bf16.gmra.mrb[0].mxu0 %v458
        %v701 = vpop.f32.mrb[0].mxu0
        %v702 = vadd.f32 0.0, %v701
        %v703 = vpop.f32.mrb[0].mxu0
        %v704 = vpop.f32.mrb[0].mxu0
        %v705 = vadd.f32 0.0, %v704
        %v706 = vpop.f32.mrb[0].mxu0
        %707 = vmatprep.mubr.bf16.mxu0 %v576
        %708 = vmatmul.mubr.bf16.gmra.mrb[0].mxu0 %v460
        %v709 = vpop.f32.mrb[0].mxu0
        %v710 = vadd.f32 0.0, %v709
        %v711 = vpop.f32.mrb[0].mxu0
        %v712 = vpop.f32.mrb[0].mxu0
        %v713 = vadd.f32 0.0, %v712
        %v714 = vpop.f32.mrb[0].mxu0
        %715 = vmatprep.mubr.bf16.mxu0 %v579
        %716 = vmatmul.mubr.bf16.gmra.mrb[0].mxu0 %v462
        %v717 = vpop.f32.mrb[0].mxu0
        %v718 = vadd.f32 0.0, %v717
        %v719 = vpop.f32.mrb[0].mxu0
        %v720 = vpop.f32.mrb[0].mxu0
        %v721 = vadd.f32 0.0, %v720
        %v722 = vpop.f32.mrb[0].mxu0
        %723 = vmatprep.mubr.bf16.mxu0 %v582
        %724 = vmatmul.mubr.bf16.gmra.mrb[0].mxu0 %v464
        %v725 = vpop.f32.mrb[0].mxu0
        %v726 = vadd.f32 0.0, %v725
        %v727 = vpop.f32.mrb[0].mxu0
        %v728 = vpop.f32.mrb[0].mxu0
        %v729 = vadd.f32 0.0, %v728
        %v730 = vpop.f32.mrb[0].mxu0
        %731 = vmatprep.mubr.bf16.mxu0 %v585
        %732 = vmatmul.mubr.bf16.gmra.mrb[0].mxu0 %v466
        %v733 = vpop.f32.mrb[0].mxu0
        %v734 = vadd.f32 0.0, %v733
        %v735 = vpop.f32.mrb[0].mxu0
        %v736 = vpop.f32.mrb[0].mxu0
        %v737 = vadd.f32 0.0, %v736
        %v738 = vpop.f32.mrb[0].mxu0
        %739 = vmatprep.mubr.bf16.mxu0 %v588
        %740 = vmatmul.mubr.bf16.gmra.mrb[0].mxu0 %v468
        %v741 = vpop.f32.mrb[0].mxu0
        %v742 = vadd.f32 0.0, %v741
        %v743 = vpop.f32.mrb[0].mxu0
        %v744 = vpop.f32.mrb[0].mxu0
        %v745 = vadd.f32 0.0, %v744
        %v746 = vpop.f32.mrb[0].mxu0
        %747 = vmatprep.mubr.bf16.mxu0 %v591
        %748 = vmatmul.mubr.bf16.gmra.mrb[0].mxu0 %v470
        %v749 = vpop.f32.mrb[0].mxu0
        %v750 = vadd.f32 0.0, %v749
        %v751 = vpop.f32.mrb[0].mxu0
        %v752 = vpop.f32.mrb[0].mxu0
        %v753 = vadd.f32 0.0, %v752
        %v754 = vpop.f32.mrb[0].mxu0
        %755 = vmatprep.mubr.bf16.mxu0 %v594
        %756 = vmatmul.mubr.bf16.gmra.mrb[0].mxu0 %v472
        %v757 = vpop.f32.mrb[0].mxu0
        %v758 = vadd.f32 0.0, %v757
        %v759 = vpop.f32.mrb[0].mxu0
        %v760 = vpop.f32.mrb[0].mxu0
        %v761 = vadd.f32 0.0, %v760
        %v762 = vpop.f32.mrb[0].mxu0
        %763 = vdwg.mxu0
        %v764 = vld [vmem:[#allocation7] sm:$0x1]
        %v766 = vlaneseq
        %v767 = vshrl.u32 %v766, 7
        %v768 = vsub.s32 0, %v767
        %v769 = vrot.slane %v764, %v768
        %v771 = vmul.f32 %v638, %v769
        %v772 = vmul.f32 %v641, %v769
        %v773 = vmul.f32 %v646, %v769
        %v774 = vmul.f32 %v649, %v769
        %v775 = vmul.f32 %v654, %v769
        %v776 = vmul.f32 %v657, %v769
        %v777 = vmul.f32 %v662, %v769
        %v778 = vmul.f32 %v665, %v769
        %v779 = vmul.f32 %v670, %v769
        %v780 = vmul.f32 %v673, %v769
        %v781 = vmul.f32 %v678, %v769
        %v782 = vmul.f32 %v681, %v769
        %v783 = vmul.f32 %v686, %v769
        %v784 = vmul.f32 %v689, %v769
        %v785 = vmul.f32 %v694, %v769
        %v786 = vmul.f32 %v697, %v769
        %v787 = vmul.f32 %v702, %v769
        %v788 = vmul.f32 %v705, %v769
        %v789 = vmul.f32 %v710, %v769
        %v790 = vmul.f32 %v713, %v769
        %v791 = vmul.f32 %v718, %v769
        %v792 = vmul.f32 %v721, %v769
        %v793 = vmul.f32 %v726, %v769
        %v794 = vmul.f32 %v729, %v769
        %v795 = vmul.f32 %v734, %v769
        %v796 = vmul.f32 %v737, %v769
        %v797 = vmul.f32 %v742, %v769
        %v798 = vmul.f32 %v745, %v769
        %v799 = vmul.f32 %v750, %v769
        %v800 = vmul.f32 %v753, %v769
        %v801 = vmul.f32 %v758, %v769
        %v802 = vmul.f32 %v761, %v769
        %v803 = vld [vmem:[#allocation8] sm:$0x1]
        %v805 = vlaneseq
        %v806 = vshrl.u32 %v805, 7
        %v807 = vsub.s32 0, %v806
        %v808 = vrot.slane %v803, %v807
        %v810 = vadd.f32 %v771, %v808
        %v811 = vadd.f32 %v772, %v808
        %v812 = vadd.f32 %v773, %v808
        %v813 = vadd.f32 %v774, %v808
        %v814 = vadd.f32 %v775, %v808
        %v815 = vadd.f32 %v776, %v808
        %v816 = vadd.f32 %v777, %v808
        %v817 = vadd.f32 %v778, %v808
        %v818 = vadd.f32 %v779, %v808
        %v819 = vadd.f32 %v780, %v808
        %v820 = vadd.f32 %v781, %v808
        %v821 = vadd.f32 %v782, %v808
        %v822 = vadd.f32 %v783, %v808
        %v823 = vadd.f32 %v784, %v808
        %v824 = vadd.f32 %v785, %v808
        %v825 = vadd.f32 %v786, %v808
        %v826 = vadd.f32 %v787, %v808
        %v827 = vadd.f32 %v788, %v808
        %v828 = vadd.f32 %v789, %v808
        %v829 = vadd.f32 %v790, %v808
        %v830 = vadd.f32 %v791, %v808
        %v831 = vadd.f32 %v792, %v808
        %v832 = vadd.f32 %v793, %v808
        %v833 = vadd.f32 %v794, %v808
        %v834 = vadd.f32 %v795, %v808
        %v835 = vadd.f32 %v796, %v808
        %v836 = vadd.f32 %v797, %v808
        %v837 = vadd.f32 %v798, %v808
        %v838 = vadd.f32 %v799, %v808
        %v839 = vadd.f32 %v800, %v808
        %v840 = vadd.f32 %v801, %v808
        %v841 = vadd.f32 %v802, %v808
        %v842 = vmax.f32 %v810, 0.0
        %v843 = vmax.f32 %v811, 0.0
        %v844 = vmax.f32 %v812, 0.0
        %v845 = vmax.f32 %v813, 0.0
        %v846 = vmax.f32 %v814, 0.0
        %v847 = vmax.f32 %v815, 0.0
        %v848 = vmax.f32 %v816, 0.0
        %v849 = vmax.f32 %v817, 0.0
        %v850 = vmax.f32 %v818, 0.0
        %v851 = vmax.f32 %v819, 0.0
        %v852 = vmax.f32 %v820, 0.0
        %v853 = vmax.f32 %v821, 0.0
        %v854 = vmax.f32 %v822, 0.0
        %v855 = vmax.f32 %v823, 0.0
        %v856 = vmax.f32 %v824, 0.0
        %v857 = vmax.f32 %v825, 0.0
        %v858 = vmax.f32 %v826, 0.0
        %v859 = vmax.f32 %v827, 0.0
        %v860 = vmax.f32 %v828, 0.0
        %v861 = vmax.f32 %v829, 0.0
        %v862 = vmax.f32 %v830, 0.0
        %v863 = vmax.f32 %v831, 0.0
        %v864 = vmax.f32 %v832, 0.0
        %v865 = vmax.f32 %v833, 0.0
        %v866 = vmax.f32 %v834, 0.0
        %v867 = vmax.f32 %v835, 0.0
        %v868 = vmax.f32 %v836, 0.0
        %v869 = vmax.f32 %v837, 0.0
        %v870 = vmax.f32 %v838, 0.0
        %v871 = vmax.f32 %v839, 0.0
        %v872 = vmax.f32 %v840, 0.0
        %v873 = vmax.f32 %v841, 0.0
        %v874 = vpack.c.bf16 %v843, %v842
        %v875 = vpack.c.bf16 %v845, %v844
        %v876 = vpack.c.bf16 %v847, %v846
        %v877 = vpack.c.bf16 %v849, %v848
        %v878 = vpack.c.bf16 %v851, %v850
        %v879 = vpack.c.bf16 %v853, %v852
        %v880 = vpack.c.bf16 %v855, %v854
        %v881 = vpack.c.bf16 %v857, %v856
        %v882 = vpack.c.bf16 %v859, %v858
        %v883 = vpack.c.bf16 %v861, %v860
        %v884 = vpack.c.bf16 %v863, %v862
        %v885 = vpack.c.bf16 %v865, %v864
        %v886 = vpack.c.bf16 %v867, %v866
        %v887 = vpack.c.bf16 %v869, %v868
        %v888 = vpack.c.bf16 %v871, %v870
        %v889 = vpack.c.bf16 %v873, %v872
        %v906 = vunpack.c.l.b16 %v874
        %v907 = vunpack.c.h.b16 %v874
        %v908 = vunpack.c.l.b16 %v875
        %v909 = vunpack.c.h.b16 %v875
        %v910 = vunpack.c.l.b16 %v876
        %v911 = vunpack.c.h.b16 %v876
        %v912 = vunpack.c.l.b16 %v877
        %v913 = vunpack.c.h.b16 %v877
        %v914 = vunpack.c.l.b16 %v878
        %v915 = vunpack.c.h.b16 %v878
        %v916 = vunpack.c.l.b16 %v879
        %v917 = vunpack.c.h.b16 %v879
        %v918 = vunpack.c.l.b16 %v880
        %v919 = vunpack.c.h.b16 %v880
        %v920 = vunpack.c.l.b16 %v881
        %v921 = vunpack.c.h.b16 %v881
        %v922 = vunpack.c.l.b16 %v882
        %v923 = vunpack.c.h.b16 %v882
        %v924 = vunpack.c.l.b16 %v883
        %v925 = vunpack.c.h.b16 %v883
        %v926 = vunpack.c.l.b16 %v884
        %v927 = vunpack.c.h.b16 %v884
        %v928 = vunpack.c.l.b16 %v885
        %v929 = vunpack.c.h.b16 %v885
        %v930 = vunpack.c.l.b16 %v886
        %v931 = vunpack.c.h.b16 %v886
        %v932 = vunpack.c.l.b16 %v887
        %v933 = vunpack.c.h.b16 %v887
        %v934 = vunpack.c.l.b16 %v888
        %v935 = vunpack.c.h.b16 %v888
        %v936 = vunpack.c.l.b16 %v889
        %v937 = vunpack.c.h.b16 %v889
        %v938 = vpack.c.b16 %v906, %v906
        %v939 = vpack.c.b16 %v907, %v907
        %v940 = vpack.c.b16 %v908, %v908
        %v941 = vpack.c.b16 %v909, %v909
        %v942 = vpack.c.b16 %v910, %v910
        %v943 = vpack.c.b16 %v911, %v911
        %v944 = vpack.c.b16 %v912, %v912
        %v945 = vpack.c.b16 %v913, %v913
        %v946 = vpack.c.b16 %v914, %v914
        %v947 = vpack.c.b16 %v915, %v915
        %v948 = vpack.c.b16 %v916, %v916
        %v949 = vpack.c.b16 %v917, %v917
        %v950 = vpack.c.b16 %v918, %v918
        %v951 = vpack.c.b16 %v919, %v919
        %v952 = vpack.c.b16 %v920, %v920
        %v953 = vpack.c.b16 %v921, %v921
        %v954 = vpack.c.b16 %v922, %v922
        %v955 = vpack.c.b16 %v923, %v923
        %v956 = vpack.c.b16 %v924, %v924
        %v957 = vpack.c.b16 %v925, %v925
        %v958 = vpack.c.b16 %v926, %v926
        %v959 = vpack.c.b16 %v927, %v927
        %v960 = vpack.c.b16 %v928, %v928
        %v961 = vpack.c.b16 %v929, %v929
        %v962 = vpack.c.b16 %v930, %v930
        %v963 = vpack.c.b16 %v931, %v931
        %v964 = vpack.c.b16 %v932, %v932
        %v965 = vpack.c.b16 %v933, %v933
        %v966 = vpack.c.b16 %v934, %v934
        %v967 = vpack.c.b16 %v935, %v935
        %v968 = vpack.c.b16 %v936, %v936
        %v969 = vpack.c.b16 %v937, %v937
        %vm1002 = vcmask 519168
        %1003 = vst.msk [vmem:[%s291] sm:$0xf] %vm1002, %v938
        %1004 = vst.msk [vmem:[%s291 + $0x4] sm:$0xf] %vm1002, %v939
        %1005 = vst.msk [vmem:[%s291 + $0x8] sm:$0xf] %vm1002, %v940
        %1006 = vst.msk [vmem:[%s291 + $0xc] sm:$0xf] %vm1002, %v941
        %1007 = vst.msk [vmem:[%s291 + $0x10] sm:$0xf] %vm1002, %v942
        %1008 = vst.msk [vmem:[%s291 + $0x14] sm:$0xf] %vm1002, %v943
        %1009 = vst.msk [vmem:[%s291 + $0x18] sm:$0xf] %vm1002, %v944
        %1010 = vst.msk [vmem:[%s291 + $0x1c] sm:$0xf] %vm1002, %v945
        %1011 = vst.msk [vmem:[%s291 + $0x20] sm:$0xf] %vm1002, %v946
        %1012 = vst.msk [vmem:[%s291 + $0x24] sm:$0xf] %vm1002, %v947
        %1013 = vst.msk [vmem:[%s291 + $0x28] sm:$0xf] %vm1002, %v948
        %1014 = vst.msk [vmem:[%s291 + $0x2c] sm:$0xf] %vm1002, %v949
        %1015 = vst.msk [vmem:[%s291 + $0x30] sm:$0xf] %vm1002, %v950
        %1016 = vst.msk [vmem:[%s291 + $0x34] sm:$0xf] %vm1002, %v951
        %1017 = vst.msk [vmem:[%s291 + $0x38] sm:$0xf] %vm1002, %v952
        %1018 = vst.msk [vmem:[%s291 + $0x3c] sm:$0xf] %vm1002, %v953
        %1019 = vst.msk [vmem:[%s291 + $0x40] sm:$0xf] %vm1002, %v954
        %1020 = vst.msk [vmem:[%s291 + $0x44] sm:$0xf] %vm1002, %v955
        %1021 = vst.msk [vmem:[%s291 + $0x48] sm:$0xf] %vm1002, %v956
        %1022 = vst.msk [vmem:[%s291 + $0x4c] sm:$0xf] %vm1002, %v957
        %1023 = vst.msk [vmem:[%s291 + $0x50] sm:$0xf] %vm1002, %v958
        %1024 = vst.msk [vmem:[%s291 + $0x54] sm:$0xf] %vm1002, %v959
        %1025 = vst.msk [vmem:[%s291 + $0x58] sm:$0xf] %vm1002, %v960
        %1026 = vst.msk [vmem:[%s291 + $0x5c] sm:$0xf] %vm1002, %v961
        %1027 = vst.msk [vmem:[%s291 + $0x60] sm:$0xf] %vm1002, %v962
        %1028 = vst.msk [vmem:[%s291 + $0x64] sm:$0xf] %vm1002, %v963
        %1029 = vst.msk [vmem:[%s291 + $0x68] sm:$0xf] %vm1002, %v964
        %1030 = vst.msk [vmem:[%s291 + $0x6c] sm:$0xf] %vm1002, %v965
        %1031 = vst.msk [vmem:[%s291 + $0x70] sm:$0xf] %vm1002, %v966
        %1032 = vst.msk [vmem:[%s291 + $0x74] sm:$0xf] %vm1002, %v967
        %1033 = vst.msk [vmem:[%s291 + $0x78] sm:$0xf] %vm1002, %v968
        %1034 = vst.msk [vmem:[%s291 + $0x7c] sm:$0xf] %vm1002, %v969
        %s1035 = sand.u32 %s149, 1
        %s1036 = scalar_lea.sflag [#allocation4], %s1035
        %s1037 = sand.u32 %s149, 1
        %s1038 = smul.addr %s1037, 128
        %s1039 = scalar_lea.vmem [#allocation10], %s1038
        // Predicated region
        $region53: #{tpu_custom_call.1} parent=35 // pred_check
          %p1040 = pneg %p159
        $region54: #{tpu_custom_call.1} parent=35 // pred_check_branch
          %1042 = sbr.rel (%p1040) target = $region56
        $region55: #{tpu_custom_call.1} parent=35 // pred_region
          %s1043 = smul.u32 32, %s28
          %s1045 = ssub.s32 2048, 2048
          %1046 = vsyncadd %s1036, %s1045
          %s1047 = sadd.s32 %s27, %s1043
          %s1048 = smul.addr %s1047, 64
          %s1049 = scalar_lea.hbm %s4, %s1048
          %s1050 = sshll.u32 %s1039, 4
          %s1051 = int_to_ptr.vmem [resolvable:$true] %s1050
          %1056 = dma.vmem_to_hbm [thread:$0]  %s1051, 2048, %s1049, %s1036, 64, 64, 4
        $region56: #{tpu_custom_call.1} parent=35 // pred_fallthru
          _
      $region36: #{tpu_custom_call.1} parent=5 // pred_fallthru
        _
      %p1057 = scmp.le.s32.totalorder 2, %s18
      // Predicated region
      $region57: #{tpu_custom_call.1} parent=5 // pred_check
        %p1058 = pneg %p1057
      $region58: #{tpu_custom_call.1} parent=5 // pred_check_branch
        %1060 = sbr.rel (%p1058) target = $region60
      $region59: #{tpu_custom_call.1} parent=5 // pred_region
        %s1061 = ssub.s32 %s18, 2
        // Predicated region
        $region61: #{tpu_custom_call.1} parent=59 // pred_check
          %p1062 = pneg %p165
        $region62: #{tpu_custom_call.1} parent=59 // pred_check_branch
          %1064 = sbr.rel (%p1062) target = $region64
        $region63: #{tpu_custom_call.1} parent=59 // pred_region
          %s1065 = sand.u32 %s150, 1
          %s1066 = scalar_lea.sflag [#allocation4], %s1065
          %s1067 = sand.u32 %s150, 1
          %s1068 = smul.addr %s1067, 128
          %s1069 = scalar_lea.vmem [#allocation10], %s1068
          %1070 = dma.done %s1066, 2048
        $region64: #{tpu_custom_call.1} parent=59 // pred_fallthru
          _
      $region60: #{tpu_custom_call.1} parent=5 // pred_fallthru
        _
    $region6: #{tpu_custom_call.1} parent=1 // loop_footer
      %s22 = sadd.s32 1, %s18
    $region7: #{tpu_custom_call.1} parent=1 // loop_footer_branch
      %17 = sbr.rel target = $region3
    $region8: #{tpu_custom_call.1} parent=1 // loop_exit
      _
    %1071 = vsyncpa [#allocation3], 1
    %s1072 = scalar_lea.sflag [#allocation3], 1
    %1073 = vsyncpa %s1072, 1
    %1074 = vsyncpa [#allocation6], 1
    %1075 = vsyncpa [#allocation9], 1
    %1076 = vsyncpa [#allocation4], 1
    %s1077 = scalar_lea.sflag [#allocation4], 1
    %1078 = vsyncpa %s1077, 1

</llo_original>
